<compile_context>
chip_gen: v7x
topology: tpu7x:2x2x1
jax: 0.10.0
libtpu: 0.0.40
codegen_flags: <defaults>
</compile_context>

<pallas_src>
import math

import jax
import jax.numpy as jnp
from jax.experimental import pallas as pl
from jax.experimental.pallas import tpu as pltpu

# ---------------- configuration (small shapes consistent with the module) -------------
INPUT_DIM = 16          # obs_dim
HIDDEN_DIM = 64         # module default hidden_dim
OUT_DIM = 8             # action dim
BATCH = 128             # total batch (single kernel invocation)
PAD_H = 128             # hidden dim zero-padded to full 128-lane vregs
PAD_O = 128             # output dim zero-padded for lane-dense stores/writeback
BN_EPS = 1e-5
LEAKY_SLOPE = 0.01      # F.leaky_relu default negative_slope


def _leaky_relu(x):
    return jnp.where(x >= 0, x, LEAKY_SLOPE * x)


# ------------------------------------ kernel ------------------------------------------
def _base_policy_kernel(x_ref,
                        w1_ref, b1_ref, w2_ref, b2_ref, w3_ref, b3_ref,
                        out_ref):
    # Whole-array refs (no grid).  BN scale/shift already folded into fc1,
    # hidden/output dims pre-padded to 128 lanes, so this is three clean
    # full-width MXU matmuls + VPU bias/leaky_relu and one unmasked store.
    x = x_ref[...]                                                          # (B, D)

    h1 = jnp.dot(x, w1_ref[...], preferred_element_type=jnp.float32) + b1_ref[...]
    h1 = _leaky_relu(h1)                                                    # (B, PAD_H)

    h2 = jnp.dot(h1, w2_ref[...], preferred_element_type=jnp.float32) + b2_ref[...]
    h2 = _leaky_relu(h2)                                                    # (B, PAD_H)

    o = jnp.dot(h2, w3_ref[...], preferred_element_type=jnp.float32) + b3_ref[...]
    out_ref[...] = _leaky_relu(o)                                           # (B, PAD_O)


# --------------------------- one-time parameter preparation ----------------------------
def _pad_to(a, shape):
    out = jnp.zeros(shape, jnp.float32)
    return out.at[tuple(slice(0, s) for s in a.shape)].set(a.astype(jnp.float32))


def prepare_params(params, running_mean=None, running_var=None, eps=BN_EPS):
    """Fold eval-mode BatchNorm1d(affine=False) into fc1 and zero-pad to lane-dense shapes.

    Done ONCE per parameter set (hoisted out of the forward pass).
    """
    d = params["w1"].shape[0]
    if running_mean is None:
        running_mean = jnp.zeros((d,), jnp.float32)
    if running_var is None:
        running_var = jnp.ones((d,), jnp.float32)

    scale = jax.lax.rsqrt(running_var + eps)                     # (D,)
    w1 = params["w1"] * scale[:, None]                           # (D, H)
    b1 = params["b1"] - (running_mean * scale) @ params["w1"]    # (H,)

    return {
        "w1": _pad_to(w1, (d, PAD_H)),
        "b1": _pad_to(b1.reshape(1, -1), (1, PAD_H)),
        "w2": _pad_to(params["w2"], (PAD_H, PAD_H)),
        "b2": _pad_to(params["b2"].reshape(1, -1), (1, PAD_H)),
        "w3": _pad_to(params["w3"], (PAD_H, PAD_O)),
        "b3": _pad_to(params["b3"].reshape(1, -1), (1, PAD_O)),
    }


# ------------------------------------ wrapper ------------------------------------------
def base_policy_forward(x, prep):
    """x: (B, INPUT_DIM) raw observations. Returns leaky_relu(fc3(...)) actions (B, OUT_DIM)."""
    B, D = x.shape
    assert D == INPUT_DIM

    vmem = pl.BlockSpec(memory_space=pltpu.MemorySpace.VMEM)
    out_padded = pl.pallas_call(
        _base_policy_kernel,
        out_shape=jax.ShapeDtypeStruct((B, PAD_O), jnp.float32),
        in_specs=[vmem] * 7,
        out_specs=vmem,
    )(x, prep["w1"], prep["b1"], prep["w2"], prep["b2"], prep["w3"], prep["b3"])

    # Lane-dense (B, 128) slab written by the kernel; slice to the logical width.
    return out_padded[:, :OUT_DIM]


# --------------------------------- pure-JAX reference ----------------------------------
def _reference_forward(x, params, running_mean=None, running_var=None, eps=BN_EPS):
    d = x.shape[1]
    if running_mean is None:
        running_mean = jnp.zeros((d,), jnp.float32)
    if running_var is None:
        running_var = jnp.ones((d,), jnp.float32)
    h = (x - running_mean) * jax.lax.rsqrt(running_var + eps)
    h = _leaky_relu(h @ params["w1"] + params["b1"])
    h = _leaky_relu(h @ params["w2"] + params["b2"])
    return _leaky_relu(h @ params["w3"] + params["b3"])


# ------------------------------------ main ---------------------------------------------
if __name__ == "__main__":
    root = jax.random.PRNGKey(0)
    k_param, k_obs = jax.random.split(root, 2)

    # Deterministic torch.nn.Linear-style init: U(-1/sqrt(fan_in), 1/sqrt(fan_in)).
    def init(k, shape, fan_in):
        bound = 1.0 / math.sqrt(fan_in)
        return jax.random.uniform(k, shape, jnp.float32, -bound, bound)

    pk = jax.random.split(k_param, 6)
    params = {
        "w1": init(pk[0], (INPUT_DIM, HIDDEN_DIM), INPUT_DIM),   # stored (in, out)
        "b1": init(pk[1], (HIDDEN_DIM,), INPUT_DIM),
        "w2": init(pk[2], (HIDDEN_DIM, HIDDEN_DIM), HIDDEN_DIM),
        "b2": init(pk[3], (HIDDEN_DIM,), HIDDEN_DIM),
        "w3": init(pk[4], (HIDDEN_DIM, OUT_DIM), HIDDEN_DIM),
        "b3": init(pk[5], (OUT_DIM,), HIDDEN_DIM),
    }

    x = jax.random.normal(k_obs, (BATCH, INPUT_DIM), jnp.float32)

    # One-time prep (BN fold + lane padding), then the kernel forward.
    prep = prepare_params(params)
    out = jax.block_until_ready(base_policy_forward(x, prep))

    ref = jax.block_until_ready(_reference_forward(x, params))
    assert out.shape == (BATCH, OUT_DIM)
    assert bool(jnp.allclose(out, ref, rtol=1e-5, atol=1e-5)), "kernel/reference mismatch"

    print("KERNEL_OK")
</pallas_src>

<mosaic_0001>
module attributes {stable_mosaic.version = 11 : i64} {
  func.func @_base_policy_kernel(%arg0: memref<128x16xf32, #tpu.memory_space<vmem>>, %arg1: memref<16x128xf32, #tpu.memory_space<vmem>>, %arg2: memref<1x128xf32, #tpu.memory_space<vmem>>, %arg3: memref<128x128xf32, #tpu.memory_space<vmem>>, %arg4: memref<1x128xf32, #tpu.memory_space<vmem>>, %arg5: memref<128x128xf32, #tpu.memory_space<vmem>>, %arg6: memref<1x128xf32, #tpu.memory_space<vmem>>, %arg7: memref<128x128xf32, #tpu.memory_space<vmem>>) attributes {dimension_semantics = [], scalar_prefetch = 0 : i64, scratch_operands = 0 : i64, tpu.core_type = #tpu.core_type<tc>} {
    %c0 = arith.constant 0 : index
    %c0_0 = arith.constant 0 : index
    %0 = vector.load %arg0[%c0, %c0_0] : memref<128x16xf32, #tpu.memory_space<vmem>>, vector<128x16xf32>
    %c0_1 = arith.constant 0 : index
    %c0_2 = arith.constant 0 : index
    %1 = vector.load %arg1[%c0_1, %c0_2] : memref<16x128xf32, #tpu.memory_space<vmem>>, vector<16x128xf32>
    %cst = arith.constant dense<0.000000e+00> : vector<128x128xf32>
    %2 = tpu.matmul %0, %1, %cst {dimension_numbers = #tpu.dot_dimension_numbers<[1], [0], [0], [1], [0, 0, 1, 1], [], []>} : vector<128x16xf32>, vector<16x128xf32>, vector<128x128xf32> -> vector<128x128xf32>
    %c0_3 = arith.constant 0 : index
    %c0_4 = arith.constant 0 : index
    %3 = vector.load %arg2[%c0_3, %c0_4] : memref<1x128xf32, #tpu.memory_space<vmem>>, vector<1x128xf32>
    %4 = vector.broadcast %3 : vector<1x128xf32> to vector<128x128xf32>
    %5 = arith.addf %2, %4 : vector<128x128xf32>
    %cst_5 = arith.constant 0.000000e+00 : f32
    %6 = vector.broadcast %cst_5 : f32 to vector<128x128xf32>
    %7 = arith.cmpf oge, %5, %6 : vector<128x128xf32>
    %cst_6 = arith.constant 0.00999999977 : f32
    %8 = vector.broadcast %cst_6 : f32 to vector<128x128xf32>
    %9 = arith.mulf %8, %5 : vector<128x128xf32>
    %10 = arith.select %7, %5, %9 : vector<128x128xi1>, vector<128x128xf32>
    %c0_7 = arith.constant 0 : index
    %c0_8 = arith.constant 0 : index
    %11 = vector.load %arg3[%c0_7, %c0_8] : memref<128x128xf32, #tpu.memory_space<vmem>>, vector<128x128xf32>
    %cst_9 = arith.constant dense<0.000000e+00> : vector<128x128xf32>
    %12 = tpu.matmul %10, %11, %cst_9 {dimension_numbers = #tpu.dot_dimension_numbers<[1], [0], [0], [1], [0, 0, 1, 1], [], []>} : vector<128x128xf32>, vector<128x128xf32>, vector<128x128xf32> -> vector<128x128xf32>
    %c0_10 = arith.constant 0 : index
    %c0_11 = arith.constant 0 : index
    %13 = vector.load %arg4[%c0_10, %c0_11] : memref<1x128xf32, #tpu.memory_space<vmem>>, vector<1x128xf32>
    %14 = vector.broadcast %13 : vector<1x128xf32> to vector<128x128xf32>
    %15 = arith.addf %12, %14 : vector<128x128xf32>
    %cst_12 = arith.constant 0.000000e+00 : f32
    %16 = vector.broadcast %cst_12 : f32 to vector<128x128xf32>
    %17 = arith.cmpf oge, %15, %16 : vector<128x128xf32>
    %cst_13 = arith.constant 0.00999999977 : f32
    %18 = vector.broadcast %cst_13 : f32 to vector<128x128xf32>
    %19 = arith.mulf %18, %15 : vector<128x128xf32>
    %20 = arith.select %17, %15, %19 : vector<128x128xi1>, vector<128x128xf32>
    %c0_14 = arith.constant 0 : index
    %c0_15 = arith.constant 0 : index
    %21 = vector.load %arg5[%c0_14, %c0_15] : memref<128x128xf32, #tpu.memory_space<vmem>>, vector<128x128xf32>
    %cst_16 = arith.constant dense<0.000000e+00> : vector<128x128xf32>
    %22 = tpu.matmul %20, %21, %cst_16 {dimension_numbers = #tpu.dot_dimension_numbers<[1], [0], [0], [1], [0, 0, 1, 1], [], []>} : vector<128x128xf32>, vector<128x128xf32>, vector<128x128xf32> -> vector<128x128xf32>
    %c0_17 = arith.constant 0 : index
    %c0_18 = arith.constant 0 : index
    %23 = vector.load %arg6[%c0_17, %c0_18] : memref<1x128xf32, #tpu.memory_space<vmem>>, vector<1x128xf32>
    %24 = vector.broadcast %23 : vector<1x128xf32> to vector<128x128xf32>
    %25 = arith.addf %22, %24 : vector<128x128xf32>
    %cst_19 = arith.constant 0.000000e+00 : f32
    %26 = vector.broadcast %cst_19 : f32 to vector<128x128xf32>
    %27 = arith.cmpf oge, %25, %26 : vector<128x128xf32>
    %cst_20 = arith.constant 0.00999999977 : f32
    %28 = vector.broadcast %cst_20 : f32 to vector<128x128xf32>
    %29 = arith.mulf %28, %25 : vector<128x128xf32>
    %30 = arith.select %27, %25, %29 : vector<128x128xi1>, vector<128x128xf32>
    %c0_21 = arith.constant 0 : index
    %c0_22 = arith.constant 0 : index
    %31 = vector.load %arg7[%c0_21, %c0_22] : memref<128x128xf32, #tpu.memory_space<vmem>>, vector<128x128xf32>
    tpu.vector_store %arg7[%c0_21, %c0_22], %30 {strides = array<i32>} : memref<128x128xf32, #tpu.memory_space<vmem>>, vector<128x128xf32>,
    return
  }
}

</mosaic_0001>

<llo_original>
// kernel: tpu_custom_call.1
$region0: #{tpu_custom_call.1}
  #allocation0 [shape = 'u32[]', space=smem, size = 0x4, offset = 0x4, fixed_abs, tag = 'smem constant byte address 0x4 - core index']
  #allocation1 [shape = 'u32[144,128]{1,0:T(1,128)}', space=vmem, size = 0x12000, scoped, tag = 'internal scratch']
  %s0 = inlined_call_operand.vmem [shape: f32[128,16], index: 0, kind: input, shape index: {}]
  %s1 = inlined_call_operand.vmem [shape: f32[16,128], index: 1, kind: input, shape index: {}]
  %s2 = inlined_call_operand.vmem [shape: f32[1,128], index: 2, kind: input, shape index: {}]
  %s3 = inlined_call_operand.vmem [shape: f32[128,128], index: 3, kind: input, shape index: {}]
  %s4 = inlined_call_operand.vmem [shape: f32[1,128], index: 4, kind: input, shape index: {}]
  %s5 = inlined_call_operand.hbm [shape: f32[128,128], index: 5, kind: input, shape index: {}]
  %s6 = inlined_call_operand.vmem [shape: f32[1,128], index: 6, kind: input, shape index: {}]
  %s7 = inlined_call_operand.hbm [shape: f32[128,128], index: 7, kind: output, shape index: {}]
  %s8 = sld [smem:[#allocation0]]
  $region42: #{tpu_custom_call.1} parent=0
    _
  %s10 = ssub.s32 1, %s8
  %s11 = scalar_select 0, %s10, %s8
  $region1: #{tpu_custom_call.1} parent=0
    #allocation2 [shape = 'u8[65536]{0}', space=vmem, size = 0x10000, scoped, tag = 'input window, operand 5, single buffered']
    #allocation3 [shape = 's32[1]{0}', space=sflag, size = 0x4, scoped, tag = 'scoped memory for tpu_custom_call.1']
    #allocation4 [shape = 's32[1]{0}', space=sflag, size = 0x4, scoped, tag = 'scoped memory for tpu_custom_call.1']
    #allocation5 [shape = 'u8[65536]{0}', space=vmem, size = 0x10000, scoped, tag = 'output window, operand 0, single buffered']
    %12 = vsyncpa [#allocation3], 0
    %13 = vsyncpa [#allocation4], 0
    // Predicated region
    $region2: #{tpu_custom_call.1} parent=1 // pred_check
      _
    $region3: #{tpu_custom_call.1} parent=1 // pred_check_branch
      %15 = sbr.rel (0) target = $region5
    $region4: #{tpu_custom_call.1} parent=1 // pred_region
      _
    $region5: #{tpu_custom_call.1} parent=1 // pred_fallthru
      _
    // Predicated region
    $region6: #{tpu_custom_call.1} parent=1 // pred_check
      _
    $region7: #{tpu_custom_call.1} parent=1 // pred_check_branch
      %17 = sbr.rel (0) target = $region9
    $region8: #{tpu_custom_call.1} parent=1 // pred_region
      _
    $region9: #{tpu_custom_call.1} parent=1 // pred_fallthru
      _
    // Predicated region
    $region10: #{tpu_custom_call.1} parent=1 // pred_check
      _
    $region11: #{tpu_custom_call.1} parent=1 // pred_check_branch
      %19 = sbr.rel (0) target = $region13
    $region12: #{tpu_custom_call.1} parent=1 // pred_region
      _
    $region13: #{tpu_custom_call.1} parent=1 // pred_fallthru
      _
    // Predicated region
    $region14: #{tpu_custom_call.1} parent=1 // pred_check
      _
    $region15: #{tpu_custom_call.1} parent=1 // pred_check_branch
      %21 = sbr.rel (0) target = $region17
    $region16: #{tpu_custom_call.1} parent=1 // pred_region
      _
    $region17: #{tpu_custom_call.1} parent=1 // pred_fallthru
      _
    // Predicated region
    $region18: #{tpu_custom_call.1} parent=1 // pred_check
      _
    $region19: #{tpu_custom_call.1} parent=1 // pred_check_branch
      %23 = sbr.rel (0) target = $region21
    $region20: #{tpu_custom_call.1} parent=1 // pred_region
      _
    $region21: #{tpu_custom_call.1} parent=1 // pred_fallthru
      _
    // Predicated region
    $region22: #{tpu_custom_call.1} parent=1 // pred_check
      _
    $region23: #{tpu_custom_call.1} parent=1 // pred_check_branch
      %25 = sbr.rel (0) target = $region25
    $region24: #{tpu_custom_call.1} parent=1 // pred_region
      %s27 = ssub.s32 2048, 2048
      %28 = vsyncadd [#allocation3], %s27
      %s29 = sshll.u32 [#allocation2], 4
      %s30 = int_to_ptr.vmem [resolvable:$true] %s29
      %35 = dma.hbm_to_vmem [thread:$0]  %s5, 2048, %s30, [#allocation3], 128, 128, 8
    $region25: #{tpu_custom_call.1} parent=1 // pred_fallthru
      _
    // Predicated region
    $region26: #{tpu_custom_call.1} parent=1 // pred_check
      _
    $region27: #{tpu_custom_call.1} parent=1 // pred_check_branch
      %37 = sbr.rel (0) target = $region29
    $region28: #{tpu_custom_call.1} parent=1 // pred_region
      _
    $region29: #{tpu_custom_call.1} parent=1 // pred_fallthru
      _
    // Predicated region
    $region30: #{tpu_custom_call.1} parent=1 // pred_check
      _
    $region31: #{tpu_custom_call.1} parent=1 // pred_check_branch
      %39 = sbr.rel (0) target = $region33
    $region32: #{tpu_custom_call.1} parent=1 // pred_region
      %40 = dma.done [#allocation3], 2048
    $region33: #{tpu_custom_call.1} parent=1 // pred_fallthru
      _
    %v41 = vld [vmem:[%s0] sm:$0xff]
    %v42 = vld [vmem:[%s0 + $0x8] sm:$0xff]
    %v43 = vld [vmem:[%s0 + $0x10] sm:$0xff]
    %v44 = vld [vmem:[%s0 + $0x18] sm:$0xff]
    %v45 = vld [vmem:[%s0 + $0x20] sm:$0xff]
    %v46 = vld [vmem:[%s0 + $0x28] sm:$0xff]
    %v47 = vld [vmem:[%s0 + $0x30] sm:$0xff]
    %v48 = vld [vmem:[%s0 + $0x38] sm:$0xff]
    %v49 = vld [vmem:[%s0 + $0x40] sm:$0xff]
    %v50 = vld [vmem:[%s0 + $0x48] sm:$0xff]
    %v51 = vld [vmem:[%s0 + $0x50] sm:$0xff]
    %v52 = vld [vmem:[%s0 + $0x58] sm:$0xff]
    %v53 = vld [vmem:[%s0 + $0x60] sm:$0xff]
    %v54 = vld [vmem:[%s0 + $0x68] sm:$0xff]
    %v55 = vld [vmem:[%s0 + $0x70] sm:$0xff]
    %v56 = vld [vmem:[%s0 + $0x78] sm:$0xff]
    %v57 = vld [vmem:[%s1] sm:$0xff]
    %v58 = vld [vmem:[%s1 + $0x8] sm:$0xff]
    %v59 = vld [vmem:[%s2] sm:$0x1]
    %v61 = vlaneseq
    %v62 = vshrl.u32 %v61, 7
    %v63 = vsub.s32 0, %v62
    %v64 = vrot.slane %v59, %v63
    %vm66 = vcmask 130048
    %v68 = vsel %vm66, %v41, 0
    %v71 = vsel %vm66, %v42, 0
    %v74 = vsel %vm66, %v43, 0
    %v77 = vsel %vm66, %v44, 0
    %v80 = vsel %vm66, %v45, 0
    %v83 = vsel %vm66, %v46, 0
    %v86 = vsel %vm66, %v47, 0
    %v89 = vsel %vm66, %v48, 0
    %v92 = vsel %vm66, %v49, 0
    %v95 = vsel %vm66, %v50, 0
    %v98 = vsel %vm66, %v51, 0
    %v101 = vsel %vm66, %v52, 0
    %v104 = vsel %vm66, %v53, 0
    %v107 = vsel %vm66, %v54, 0
    %v110 = vsel %vm66, %v55, 0
    %v113 = vsel %vm66, %v56, 0
    %115 = vmatprep.subr.mxu0 0.0
    %116 = vmatpush1.msra.mxu0 %v57
    %117 = vmatprep.subr.mxu0 0.0
    %118 = vmatpush1.msra.mxu0 %v58
    %119 = vmatprep.subr.mxu0 0.0
    %120 = vmatpush1.msra.mxu0 0.0
    %121 = vmatprep.subr.mxu0 0.0
    %122 = vmatpush1.msra.mxu0 0.0
    %123 = vmatprep.subr.mxu0 0.0
    %124 = vmatpush1.msra.mxu0 0.0
    %125 = vmatprep.subr.mxu0 0.0
    %126 = vmatpush1.msra.mxu0 0.0
    %127 = vmatprep.subr.mxu0 0.0
    %128 = vmatpush1.msra.mxu0 0.0
    %129 = vmatprep.subr.mxu0 0.0
    %130 = vmatpush1.msra.mxu0 0.0
    %131 = vmatprep.subr.mxu0 0.0
    %132 = vmatpush1.msra.mxu0 0.0
    %133 = vmatprep.subr.mxu0 0.0
    %134 = vmatpush1.msra.mxu0 0.0
    %135 = vmatprep.subr.mxu0 0.0
    %136 = vmatpush1.msra.mxu0 0.0
    %137 = vmatprep.subr.mxu0 0.0
    %138 = vmatpush1.msra.mxu0 0.0
    %139 = vmatprep.subr.mxu0 0.0
    %140 = vmatpush1.msra.mxu0 0.0
    %141 = vmatprep.subr.mxu0 0.0
    %142 = vmatpush1.msra.mxu0 0.0
    %143 = vmatprep.subr.mxu0 0.0
    %144 = vmatpush1.msra.mxu0 0.0
    %145 = vmatprep.subr.mxu0 0.0
    %146 = vmatpush1.msra.mxu0 0.0
    %147 = vmatprep.subr.mxu0 0.0
    %148 = vmatpush1.msra.mxu0 0.0
    %149 = vmatprep.subr.mxu0 0.0
    %150 = vmatpush1.msra.mxu0 0.0
    %151 = vmatprep.subr.mxu0 0.0
    %152 = vmatpush1.msra.mxu0 0.0
    %153 = vmatprep.subr.mxu0 0.0
    %154 = vmatpush1.msra.mxu0 0.0
    %155 = vmatprep.subr.mxu0 0.0
    %156 = vmatpush1.msra.mxu0 0.0
    %157 = vmatprep.subr.mxu0 0.0
    %158 = vmatpush1.msra.mxu0 0.0
    %159 = vmatprep.subr.mxu0 0.0
    %160 = vmatpush1.msra.mxu0 0.0
    %161 = vmatprep.subr.mxu0 0.0
    %162 = vmatpush1.msra.mxu0 0.0
    %163 = vmatprep.subr.mxu0 0.0
    %164 = vmatpush1.msra.mxu0 0.0
    %165 = vmatprep.subr.mxu0 0.0
    %166 = vmatpush1.msra.mxu0 0.0
    %167 = vmatprep.subr.mxu0 0.0
    %168 = vmatpush1.msra.mxu0 0.0
    %169 = vmatprep.subr.mxu0 0.0
    %170 = vmatpush1.msra.mxu0 0.0
    %171 = vmatprep.subr.mxu0 0.0
    %172 = vmatpush1.msra.mxu0 0.0
    %173 = vmatprep.subr.mxu0 0.0
    %174 = vmatpush1.msra.mxu0 0.0
    %175 = vmatprep.subr.mxu0 0.0
    %176 = vmatpush1.msra.mxu0 0.0
    %177 = vmatprep.subr.mxu0 0.0
    %178 = vmatpush1.msra.mxu0 0.0
    %179 = vmatprep.mubr.f32.mxu0 0.0
    %180 = vmatmul.mubr.f32.gmra.mrb[0].mxu0 %v68
    %v181 = vpop.f32.mrb[0].mxu0
    %v182 = vadd.f32 %v64, %v181
    %v183 = vpop.f32.mrb[0].mxu0
    %184 = vmatprep.mubr.f32.mxu0 0.0
    %185 = vmatmul.mubr.f32.gmra.mrb[0].mxu0 %v71
    %v186 = vpop.f32.mrb[0].mxu0
    %v187 = vadd.f32 %v64, %v186
    %v188 = vpop.f32.mrb[0].mxu0
    %189 = vmatprep.mubr.f32.mxu0 0.0
    %190 = vmatmul.mubr.f32.gmra.mrb[0].mxu0 %v74
    %v191 = vpop.f32.mrb[0].mxu0
    %v192 = vadd.f32 %v64, %v191
    %v193 = vpop.f32.mrb[0].mxu0
    %194 = vmatprep.mubr.f32.mxu0 0.0
    %195 = vmatmul.mubr.f32.gmra.mrb[0].mxu0 %v77
    %v196 = vpop.f32.mrb[0].mxu0
    %v197 = vadd.f32 %v64, %v196
    %v198 = vpop.f32.mrb[0].mxu0
    %199 = vmatprep.mubr.f32.mxu0 0.0
    %200 = vmatmul.mubr.f32.gmra.mrb[0].mxu0 %v80
    %v201 = vpop.f32.mrb[0].mxu0
    %v202 = vadd.f32 %v64, %v201
    %v203 = vpop.f32.mrb[0].mxu0
    %204 = vmatprep.mubr.f32.mxu0 0.0
    %205 = vmatmul.mubr.f32.gmra.mrb[0].mxu0 %v83
    %v206 = vpop.f32.mrb[0].mxu0
    %v207 = vadd.f32 %v64, %v206
    %v208 = vpop.f32.mrb[0].mxu0
    %209 = vmatprep.mubr.f32.mxu0 0.0
    %210 = vmatmul.mubr.f32.gmra.mrb[0].mxu0 %v86
    %v211 = vpop.f32.mrb[0].mxu0
    %v212 = vadd.f32 %v64, %v211
    %v213 = vpop.f32.mrb[0].mxu0
    %214 = vmatprep.mubr.f32.mxu0 0.0
    %215 = vmatmul.mubr.f32.gmra.mrb[0].mxu0 %v89
    %v216 = vpop.f32.mrb[0].mxu0
    %v217 = vadd.f32 %v64, %v216
    %v218 = vpop.f32.mrb[0].mxu0
    %219 = vmatprep.mubr.f32.mxu0 0.0
    %220 = vmatmul.mubr.f32.gmra.mrb[0].mxu0 %v92
    %v221 = vpop.f32.mrb[0].mxu0
    %v222 = vadd.f32 %v64, %v221
    %v223 = vpop.f32.mrb[0].mxu0
    %224 = vmatprep.mubr.f32.mxu0 0.0
    %225 = vmatmul.mubr.f32.gmra.mrb[0].mxu0 %v95
    %v226 = vpop.f32.mrb[0].mxu0
    %v227 = vadd.f32 %v64, %v226
    %v228 = vpop.f32.mrb[0].mxu0
    %229 = vmatprep.mubr.f32.mxu0 0.0
    %230 = vmatmul.mubr.f32.gmra.mrb[0].mxu0 %v98
    %v231 = vpop.f32.mrb[0].mxu0
    %v232 = vadd.f32 %v64, %v231
    %v233 = vpop.f32.mrb[0].mxu0
    %234 = vmatprep.mubr.f32.mxu0 0.0
    %235 = vmatmul.mubr.f32.gmra.mrb[0].mxu0 %v101
    %v236 = vpop.f32.mrb[0].mxu0
    %v237 = vadd.f32 %v64, %v236
    %v238 = vpop.f32.mrb[0].mxu0
    %239 = vmatprep.mubr.f32.mxu0 0.0
    %240 = vmatmul.mubr.f32.gmra.mrb[0].mxu0 %v104
    %v241 = vpop.f32.mrb[0].mxu0
    %v242 = vadd.f32 %v64, %v241
    %v243 = vpop.f32.mrb[0].mxu0
    %244 = vmatprep.mubr.f32.mxu0 0.0
    %245 = vmatmul.mubr.f32.gmra.mrb[0].mxu0 %v107
    %v246 = vpop.f32.mrb[0].mxu0
    %v247 = vadd.f32 %v64, %v246
    %v248 = vpop.f32.mrb[0].mxu0
    %249 = vmatprep.mubr.f32.mxu0 0.0
    %250 = vmatmul.mubr.f32.gmra.mrb[0].mxu0 %v110
    %v251 = vpop.f32.mrb[0].mxu0
    %v252 = vadd.f32 %v64, %v251
    %v253 = vpop.f32.mrb[0].mxu0
    %254 = vmatprep.mubr.f32.mxu0 0.0
    %255 = vmatmul.mubr.f32.gmra.mrb[0].mxu0 %v113
    %v256 = vpop.f32.mrb[0].mxu0
    %v257 = vadd.f32 %v64, %v256
    %v258 = vpop.f32.mrb[0].mxu0
    %259 = vdwg.mxu0
    %vm260 = vcmp.ge.f32.partialorder %v182, 0.0
    %vm261 = vcmp.ge.f32.partialorder %v187, 0.0
    %vm262 = vcmp.ge.f32.partialorder %v192, 0.0
    %vm263 = vcmp.ge.f32.partialorder %v197, 0.0
    %vm264 = vcmp.ge.f32.partialorder %v202, 0.0
    %vm265 = vcmp.ge.f32.partialorder %v207, 0.0
    %vm266 = vcmp.ge.f32.partialorder %v212, 0.0
    %vm267 = vcmp.ge.f32.partialorder %v217, 0.0
    %vm268 = vcmp.ge.f32.partialorder %v222, 0.0
    %vm269 = vcmp.ge.f32.partialorder %v227, 0.0
    %vm270 = vcmp.ge.f32.partialorder %v232, 0.0
    %vm271 = vcmp.ge.f32.partialorder %v237, 0.0
    %vm272 = vcmp.ge.f32.partialorder %v242, 0.0
    %vm273 = vcmp.ge.f32.partialorder %v247, 0.0
    %vm274 = vcmp.ge.f32.partialorder %v252, 0.0
    %vm275 = vcmp.ge.f32.partialorder %v257, 0.0
    %v276 = vmul.f32 %v182, 0.01
    %v277 = vmul.f32 %v187, 0.01
    %v278 = vmul.f32 %v192, 0.01
    %v279 = vmul.f32 %v197, 0.01
    %v280 = vmul.f32 %v202, 0.01
    %v281 = vmul.f32 %v207, 0.01
    %v282 = vmul.f32 %v212, 0.01
    %v283 = vmul.f32 %v217, 0.01
    %v284 = vmul.f32 %v222, 0.01
    %v285 = vmul.f32 %v227, 0.01
    %v286 = vmul.f32 %v232, 0.01
    %v287 = vmul.f32 %v237, 0.01
    %v288 = vmul.f32 %v242, 0.01
    %v289 = vmul.f32 %v247, 0.01
    %v290 = vmul.f32 %v252, 0.01
    %v291 = vmul.f32 %v257, 0.01
    %v292 = vsel %vm260, %v182, %v276
    %v293 = vsel %vm261, %v187, %v277
    %v294 = vsel %vm262, %v192, %v278
    %v295 = vsel %vm263, %v197, %v279
    %v296 = vsel %vm264, %v202, %v280
    %v297 = vsel %vm265, %v207, %v281
    %v298 = vsel %vm266, %v212, %v282
    %v299 = vsel %vm267, %v217, %v283
    %v300 = vsel %vm268, %v222, %v284
    %v301 = vsel %vm269, %v227, %v285
    %v302 = vsel %vm270, %v232, %v286
    %v303 = vsel %vm271, %v237, %v287
    %v304 = vsel %vm272, %v242, %v288
    %v305 = vsel %vm273, %v247, %v289
    %v306 = vsel %vm274, %v252, %v290
    %v307 = vsel %vm275, %v257, %v291
    %v308 = vld [vmem:[%s3] sm:$0xff]
    %v309 = vld [vmem:[%s3 + $0x8] sm:$0xff]
    %v310 = vld [vmem:[%s3 + $0x10] sm:$0xff]
    %v311 = vld [vmem:[%s3 + $0x18] sm:$0xff]
    %v312 = vld [vmem:[%s3 + $0x20] sm:$0xff]
    %v313 = vld [vmem:[%s3 + $0x28] sm:$0xff]
    %v314 = vld [vmem:[%s3 + $0x30] sm:$0xff]
    %v315 = vld [vmem:[%s3 + $0x38] sm:$0xff]
    %v316 = vld [vmem:[%s3 + $0x40] sm:$0xff]
    %v317 = vld [vmem:[%s3 + $0x48] sm:$0xff]
    %v318 = vld [vmem:[%s3 + $0x50] sm:$0xff]
    %v319 = vld [vmem:[%s3 + $0x58] sm:$0xff]
    %v320 = vld [vmem:[%s3 + $0x60] sm:$0xff]
    %v321 = vld [vmem:[%s3 + $0x68] sm:$0xff]
    %v322 = vld [vmem:[%s3 + $0x70] sm:$0xff]
    %v323 = vld [vmem:[%s3 + $0x78] sm:$0xff]
    %v324 = vld [vmem:[%s4] sm:$0x1]
    %v326 = vlaneseq
    %v327 = vshrl.u32 %v326, 7
    %v328 = vsub.s32 0, %v327
    %v329 = vrot.slane %v324, %v328
    %331 = vmatprep.subr.mxu0 0.0
    %332 = vmatpush1.msra.mxu0 %v308
    %333 = vmatprep.subr.mxu0 0.0
    %334 = vmatpush1.msra.mxu0 %v309
    %335 = vmatprep.subr.mxu0 0.0
    %336 = vmatpush1.msra.mxu0 %v310
    %337 = vmatprep.subr.mxu0 0.0
    %338 = vmatpush1.msra.mxu0 %v311
    %339 = vmatprep.subr.mxu0 0.0
    %340 = vmatpush1.msra.mxu0 %v312
    %341 = vmatprep.subr.mxu0 0.0
    %342 = vmatpush1.msra.mxu0 %v313
    %343 = vmatprep.subr.mxu0 0.0
    %344 = vmatpush1.msra.mxu0 %v314
    %345 = vmatprep.subr.mxu0 0.0
    %346 = vmatpush1.msra.mxu0 %v315
    %347 = vmatprep.subr.mxu0 0.0
    %348 = vmatpush1.msra.mxu0 %v316
    %349 = vmatprep.subr.mxu0 0.0
    %350 = vmatpush1.msra.mxu0 %v317
    %351 = vmatprep.subr.mxu0 0.0
    %352 = vmatpush1.msra.mxu0 %v318
    %353 = vmatprep.subr.mxu0 0.0
    %354 = vmatpush1.msra.mxu0 %v319
    %355 = vmatprep.subr.mxu0 0.0
    %356 = vmatpush1.msra.mxu0 %v320
    %357 = vmatprep.subr.mxu0 0.0
    %358 = vmatpush1.msra.mxu0 %v321
    %359 = vmatprep.subr.mxu0 0.0
    %360 = vmatpush1.msra.mxu0 %v322
    %361 = vmatprep.subr.mxu0 0.0
    %362 = vmatpush1.msra.mxu0 %v323
    %363 = vmatprep.subr.mxu0 0.0
    %364 = vmatpush1.msra.mxu0 0.0
    %365 = vmatprep.subr.mxu0 0.0
    %366 = vmatpush1.msra.mxu0 0.0
    %367 = vmatprep.subr.mxu0 0.0
    %368 = vmatpush1.msra.mxu0 0.0
    %369 = vmatprep.subr.mxu0 0.0
    %370 = vmatpush1.msra.mxu0 0.0
    %371 = vmatprep.subr.mxu0 0.0
    %372 = vmatpush1.msra.mxu0 0.0
    %373 = vmatprep.subr.mxu0 0.0
    %374 = vmatpush1.msra.mxu0 0.0
    %375 = vmatprep.subr.mxu0 0.0
    %376 = vmatpush1.msra.mxu0 0.0
    %377 = vmatprep.subr.mxu0 0.0
    %378 = vmatpush1.msra.mxu0 0.0
    %379 = vmatprep.subr.mxu0 0.0
    %380 = vmatpush1.msra.mxu0 0.0
    %381 = vmatprep.subr.mxu0 0.0
    %382 = vmatpush1.msra.mxu0 0.0
    %383 = vmatprep.subr.mxu0 0.0
    %384 = vmatpush1.msra.mxu0 0.0
    %385 = vmatprep.subr.mxu0 0.0
    %386 = vmatpush1.msra.mxu0 0.0
    %387 = vmatprep.subr.mxu0 0.0
    %388 = vmatpush1.msra.mxu0 0.0
    %389 = vmatprep.subr.mxu0 0.0
    %390 = vmatpush1.msra.mxu0 0.0
    %391 = vmatprep.subr.mxu0 0.0
    %392 = vmatpush1.msra.mxu0 0.0
    %393 = vmatprep.subr.mxu0 0.0
    %394 = vmatpush1.msra.mxu0 0.0
    %395 = vmatprep.mubr.f32.mxu0 0.0
    %396 = vmatmul.mubr.f32.gmra.mrb[0].mxu0 %v292
    %v397 = vpop.f32.mrb[0].mxu0
    %v398 = vadd.f32 %v329, %v397
    %v399 = vpop.f32.mrb[0].mxu0
    %400 = vmatprep.mubr.f32.mxu0 0.0
    %401 = vmatmul.mubr.f32.gmra.mrb[0].mxu0 %v293
    %v402 = vpop.f32.mrb[0].mxu0
    %v403 = vadd.f32 %v329, %v402
    %v404 = vpop.f32.mrb[0].mxu0
    %405 = vmatprep.mubr.f32.mxu0 0.0
    %406 = vmatmul.mubr.f32.gmra.mrb[0].mxu0 %v294
    %v407 = vpop.f32.mrb[0].mxu0
    %v408 = vadd.f32 %v329, %v407
    %v409 = vpop.f32.mrb[0].mxu0
    %410 = vmatprep.mubr.f32.mxu0 0.0
    %411 = vmatmul.mubr.f32.gmra.mrb[0].mxu0 %v295
    %v412 = vpop.f32.mrb[0].mxu0
    %v413 = vadd.f32 %v329, %v412
    %v414 = vpop.f32.mrb[0].mxu0
    %415 = vmatprep.mubr.f32.mxu0 0.0
    %416 = vmatmul.mubr.f32.gmra.mrb[0].mxu0 %v296
    %v417 = vpop.f32.mrb[0].mxu0
    %v418 = vadd.f32 %v329, %v417
    %v419 = vpop.f32.mrb[0].mxu0
    %420 = vmatprep.mubr.f32.mxu0 0.0
    %421 = vmatmul.mubr.f32.gmra.mrb[0].mxu0 %v297
    %v422 = vpop.f32.mrb[0].mxu0
    %v423 = vadd.f32 %v329, %v422
    %v424 = vpop.f32.mrb[0].mxu0
    %425 = vmatprep.mubr.f32.mxu0 0.0
    %426 = vmatmul.mubr.f32.gmra.mrb[0].mxu0 %v298
    %v427 = vpop.f32.mrb[0].mxu0
    %v428 = vadd.f32 %v329, %v427
    %v429 = vpop.f32.mrb[0].mxu0
    %430 = vmatprep.mubr.f32.mxu0 0.0
    %431 = vmatmul.mubr.f32.gmra.mrb[0].mxu0 %v299
    %v432 = vpop.f32.mrb[0].mxu0
    %v433 = vadd.f32 %v329, %v432
    %v434 = vpop.f32.mrb[0].mxu0
    %435 = vmatprep.mubr.f32.mxu0 0.0
    %436 = vmatmul.mubr.f32.gmra.mrb[0].mxu0 %v300
    %v437 = vpop.f32.mrb[0].mxu0
    %v438 = vadd.f32 %v329, %v437
    %v439 = vpop.f32.mrb[0].mxu0
    %440 = vmatprep.mubr.f32.mxu0 0.0
    %441 = vmatmul.mubr.f32.gmra.mrb[0].mxu0 %v301
    %v442 = vpop.f32.mrb[0].mxu0
    %v443 = vadd.f32 %v329, %v442
    %v444 = vpop.f32.mrb[0].mxu0
    %445 = vmatprep.mubr.f32.mxu0 0.0
    %446 = vmatmul.mubr.f32.gmra.mrb[0].mxu0 %v302
    %v447 = vpop.f32.mrb[0].mxu0
    %v448 = vadd.f32 %v329, %v447
    %v449 = vpop.f32.mrb[0].mxu0
    %450 = vmatprep.mubr.f32.mxu0 0.0
    %451 = vmatmul.mubr.f32.gmra.mrb[0].mxu0 %v303
    %v452 = vpop.f32.mrb[0].mxu0
    %v453 = vadd.f32 %v329, %v452
    %v454 = vpop.f32.mrb[0].mxu0
    %455 = vmatprep.mubr.f32.mxu0 0.0
    %456 = vmatmul.mubr.f32.gmra.mrb[0].mxu0 %v304
    %v457 = vpop.f32.mrb[0].mxu0
    %v458 = vadd.f32 %v329, %v457
    %v459 = vpop.f32.mrb[0].mxu0
    %460 = vmatprep.mubr.f32.mxu0 0.0
    %461 = vmatmul.mubr.f32.gmra.mrb[0].mxu0 %v305
    %v462 = vpop.f32.mrb[0].mxu0
    %v463 = vadd.f32 %v329, %v462
    %v464 = vpop.f32.mrb[0].mxu0
    %465 = vmatprep.mubr.f32.mxu0 0.0
    %466 = vmatmul.mubr.f32.gmra.mrb[0].mxu0 %v306
    %v467 = vpop.f32.mrb[0].mxu0
    %v468 = vadd.f32 %v329, %v467
    %v469 = vpop.f32.mrb[0].mxu0
    %470 = vmatprep.mubr.f32.mxu0 0.0
    %471 = vmatmul.mubr.f32.gmra.mrb[0].mxu0 %v307
    %v472 = vpop.f32.mrb[0].mxu0
    %v473 = vadd.f32 %v329, %v472
    %v474 = vpop.f32.mrb[0].mxu0
    %475 = vdwg.mxu0
    %vm476 = vcmp.ge.f32.partialorder %v398, 0.0
    %vm477 = vcmp.ge.f32.partialorder %v403, 0.0
    %vm478 = vcmp.ge.f32.partialorder %v408, 0.0
    %vm479 = vcmp.ge.f32.partialorder %v413, 0.0
    %vm480 = vcmp.ge.f32.partialorder %v418, 0.0
    %vm481 = vcmp.ge.f32.partialorder %v423, 0.0
    %vm482 = vcmp.ge.f32.partialorder %v428, 0.0
    %vm483 = vcmp.ge.f32.partialorder %v433, 0.0
    %vm484 = vcmp.ge.f32.partialorder %v438, 0.0
    %vm485 = vcmp.ge.f32.partialorder %v443, 0.0
    %vm486 = vcmp.ge.f32.partialorder %v448, 0.0
    %vm487 = vcmp.ge.f32.partialorder %v453, 0.0
    %vm488 = vcmp.ge.f32.partialorder %v458, 0.0
    %vm489 = vcmp.ge.f32.partialorder %v463, 0.0
    %vm490 = vcmp.ge.f32.partialorder %v468, 0.0
    %vm491 = vcmp.ge.f32.partialorder %v473, 0.0
    %v492 = vmul.f32 %v398, 0.01
    %v493 = vmul.f32 %v403, 0.01
    %v494 = vmul.f32 %v408, 0.01
    %v495 = vmul.f32 %v413, 0.01
    %v496 = vmul.f32 %v418, 0.01
    %v497 = vmul.f32 %v423, 0.01
    %v498 = vmul.f32 %v428, 0.01
    %v499 = vmul.f32 %v433, 0.01
    %v500 = vmul.f32 %v438, 0.01
    %v501 = vmul.f32 %v443, 0.01
    %v502 = vmul.f32 %v448, 0.01
    %v503 = vmul.f32 %v453, 0.01
    %v504 = vmul.f32 %v458, 0.01
    %v505 = vmul.f32 %v463, 0.01
    %v506 = vmul.f32 %v468, 0.01
    %v507 = vmul.f32 %v473, 0.01
    %v508 = vsel %vm476, %v398, %v492
    %v509 = vsel %vm477, %v403, %v493
    %v510 = vsel %vm478, %v408, %v494
    %v511 = vsel %vm479, %v413, %v495
    %v512 = vsel %vm480, %v418, %v496
    %v513 = vsel %vm481, %v423, %v497
    %v514 = vsel %vm482, %v428, %v498
    %v515 = vsel %vm483, %v433, %v499
    %v516 = vsel %vm484, %v438, %v500
    %v517 = vsel %vm485, %v443, %v501
    %v518 = vsel %vm486, %v448, %v502
    %v519 = vsel %vm487, %v453, %v503
    %v520 = vsel %vm488, %v458, %v504
    %v521 = vsel %vm489, %v463, %v505
    %v522 = vsel %vm490, %v468, %v506
    %v523 = vsel %vm491, %v473, %v507
    %v524 = vld [vmem:[#allocation2] sm:$0xff]
    %v525 = vld [vmem:[#allocation2 + $0x8] sm:$0xff]
    %v526 = vld [vmem:[#allocation2 + $0x10] sm:$0xff]
    %v527 = vld [vmem:[#allocation2 + $0x18] sm:$0xff]
    %v528 = vld [vmem:[#allocation2 + $0x20] sm:$0xff]
    %v529 = vld [vmem:[#allocation2 + $0x28] sm:$0xff]
    %v530 = vld [vmem:[#allocation2 + $0x30] sm:$0xff]
    %v531 = vld [vmem:[#allocation2 + $0x38] sm:$0xff]
    %v532 = vld [vmem:[#allocation2 + $0x40] sm:$0xff]
    %v533 = vld [vmem:[#allocation2 + $0x48] sm:$0xff]
    %v534 = vld [vmem:[#allocation2 + $0x50] sm:$0xff]
    %v535 = vld [vmem:[#allocation2 + $0x58] sm:$0xff]
    %v536 = vld [vmem:[#allocation2 + $0x60] sm:$0xff]
    %v537 = vld [vmem:[#allocation2 + $0x68] sm:$0xff]
    %v538 = vld [vmem:[#allocation2 + $0x70] sm:$0xff]
    %v539 = vld [vmem:[#allocation2 + $0x78] sm:$0xff]
    %v540 = vld [vmem:[%s6] sm:$0x1]
    %v542 = vlaneseq
    %v543 = vshrl.u32 %v542, 7
    %v544 = vsub.s32 0, %v543
    %v545 = vrot.slane %v540, %v544
    %547 = vmatprep.subr.mxu0 0.0
    %548 = vmatpush1.msra.mxu0 %v524
    %549 = vmatprep.subr.mxu0 0.0
    %550 = vmatpush1.msra.mxu0 %v525
    %551 = vmatprep.subr.mxu0 0.0
    %552 = vmatpush1.msra.mxu0 %v526
    %553 = vmatprep.subr.mxu0 0.0
    %554 = vmatpush1.msra.mxu0 %v527
    %555 = vmatprep.subr.mxu0 0.0
    %556 = vmatpush1.msra.mxu0 %v528
    %557 = vmatprep.subr.mxu0 0.0
    %558 = vmatpush1.msra.mxu0 %v529
    %559 = vmatprep.subr.mxu0 0.0
    %560 = vmatpush1.msra.mxu0 %v530
    %561 = vmatprep.subr.mxu0 0.0
    %562 = vmatpush1.msra.mxu0 %v531
    %563 = vmatprep.subr.mxu0 0.0
    %564 = vmatpush1.msra.mxu0 %v532
    %565 = vmatprep.subr.mxu0 0.0
    %566 = vmatpush1.msra.mxu0 %v533
    %567 = vmatprep.subr.mxu0 0.0
    %568 = vmatpush1.msra.mxu0 %v534
    %569 = vmatprep.subr.mxu0 0.0
    %570 = vmatpush1.msra.mxu0 %v535
    %571 = vmatprep.subr.mxu0 0.0
    %572 = vmatpush1.msra.mxu0 %v536
    %573 = vmatprep.subr.mxu0 0.0
    %574 = vmatpush1.msra.mxu0 %v537
    %575 = vmatprep.subr.mxu0 0.0
    %576 = vmatpush1.msra.mxu0 %v538
    %577 = vmatprep.subr.mxu0 0.0
    %578 = vmatpush1.msra.mxu0 %v539
    %579 = vmatprep.subr.mxu0 0.0
    %580 = vmatpush1.msra.mxu0 0.0
    %581 = vmatprep.subr.mxu0 0.0
    %582 = vmatpush1.msra.mxu0 0.0
    %583 = vmatprep.subr.mxu0 0.0
    %584 = vmatpush1.msra.mxu0 0.0
    %585 = vmatprep.subr.mxu0 0.0
    %586 = vmatpush1.msra.mxu0 0.0
    %587 = vmatprep.subr.mxu0 0.0
    %588 = vmatpush1.msra.mxu0 0.0
    %589 = vmatprep.subr.mxu0 0.0
    %590 = vmatpush1.msra.mxu0 0.0
    %591 = vmatprep.subr.mxu0 0.0
    %592 = vmatpush1.msra.mxu0 0.0
    %593 = vmatprep.subr.mxu0 0.0
    %594 = vmatpush1.msra.mxu0 0.0
    %595 = vmatprep.subr.mxu0 0.0
    %596 = vmatpush1.msra.mxu0 0.0
    %597 = vmatprep.subr.mxu0 0.0
    %598 = vmatpush1.msra.mxu0 0.0
    %599 = vmatprep.subr.mxu0 0.0
    %600 = vmatpush1.msra.mxu0 0.0
    %601 = vmatprep.subr.mxu0 0.0
    %602 = vmatpush1.msra.mxu0 0.0
    %603 = vmatprep.subr.mxu0 0.0
    %604 = vmatpush1.msra.mxu0 0.0
    %605 = vmatprep.subr.mxu0 0.0
    %606 = vmatpush1.msra.mxu0 0.0
    %607 = vmatprep.subr.mxu0 0.0
    %608 = vmatpush1.msra.mxu0 0.0
    %609 = vmatprep.subr.mxu0 0.0
    %610 = vmatpush1.msra.mxu0 0.0
    %611 = vmatprep.mubr.f32.mxu0 0.0
    %612 = vmatmul.mubr.f32.gmra.mrb[0].mxu0 %v508
    %v613 = vpop.f32.mrb[0].mxu0
    %v614 = vadd.f32 %v545, %v613
    %v615 = vpop.f32.mrb[0].mxu0
    %616 = vmatprep.mubr.f32.mxu0 0.0
    %617 = vmatmul.mubr.f32.gmra.mrb[0].mxu0 %v509
    %v618 = vpop.f32.mrb[0].mxu0
    %v619 = vadd.f32 %v545, %v618
    %v620 = vpop.f32.mrb[0].mxu0
    %621 = vmatprep.mubr.f32.mxu0 0.0
    %622 = vmatmul.mubr.f32.gmra.mrb[0].mxu0 %v510
    %v623 = vpop.f32.mrb[0].mxu0
    %v624 = vadd.f32 %v545, %v623
    %v625 = vpop.f32.mrb[0].mxu0
    %626 = vmatprep.mubr.f32.mxu0 0.0
    %627 = vmatmul.mubr.f32.gmra.mrb[0].mxu0 %v511
    %v628 = vpop.f32.mrb[0].mxu0
    %v629 = vadd.f32 %v545, %v628
    %v630 = vpop.f32.mrb[0].mxu0
    %631 = vmatprep.mubr.f32.mxu0 0.0
    %632 = vmatmul.mubr.f32.gmra.mrb[0].mxu0 %v512
    %v633 = vpop.f32.mrb[0].mxu0
    %v634 = vadd.f32 %v545, %v633
    %v635 = vpop.f32.mrb[0].mxu0
    %636 = vmatprep.mubr.f32.mxu0 0.0
    %637 = vmatmul.mubr.f32.gmra.mrb[0].mxu0 %v513
    %v638 = vpop.f32.mrb[0].mxu0
    %v639 = vadd.f32 %v545, %v638
    %v640 = vpop.f32.mrb[0].mxu0
    %641 = vmatprep.mubr.f32.mxu0 0.0
    %642 = vmatmul.mubr.f32.gmra.mrb[0].mxu0 %v514
    %v643 = vpop.f32.mrb[0].mxu0
    %v644 = vadd.f32 %v545, %v643
    %v645 = vpop.f32.mrb[0].mxu0
    %646 = vmatprep.mubr.f32.mxu0 0.0
    %647 = vmatmul.mubr.f32.gmra.mrb[0].mxu0 %v515
    %v648 = vpop.f32.mrb[0].mxu0
    %v649 = vadd.f32 %v545, %v648
    %v650 = vpop.f32.mrb[0].mxu0
    %651 = vmatprep.mubr.f32.mxu0 0.0
    %652 = vmatmul.mubr.f32.gmra.mrb[0].mxu0 %v516
    %v653 = vpop.f32.mrb[0].mxu0
    %v654 = vadd.f32 %v545, %v653
    %v655 = vpop.f32.mrb[0].mxu0
    %656 = vmatprep.mubr.f32.mxu0 0.0
    %657 = vmatmul.mubr.f32.gmra.mrb[0].mxu0 %v517
    %v658 = vpop.f32.mrb[0].mxu0
    %v659 = vadd.f32 %v545, %v658
    %v660 = vpop.f32.mrb[0].mxu0
    %661 = vmatprep.mubr.f32.mxu0 0.0
    %662 = vmatmul.mubr.f32.gmra.mrb[0].mxu0 %v518
    %v663 = vpop.f32.mrb[0].mxu0
    %v664 = vadd.f32 %v545, %v663
    %v665 = vpop.f32.mrb[0].mxu0
    %666 = vmatprep.mubr.f32.mxu0 0.0
    %667 = vmatmul.mubr.f32.gmra.mrb[0].mxu0 %v519
    %v668 = vpop.f32.mrb[0].mxu0
    %v669 = vadd.f32 %v545, %v668
    %v670 = vpop.f32.mrb[0].mxu0
    %671 = vmatprep.mubr.f32.mxu0 0.0
    %672 = vmatmul.mubr.f32.gmra.mrb[0].mxu0 %v520
    %v673 = vpop.f32.mrb[0].mxu0
    %v674 = vadd.f32 %v545, %v673
    %v675 = vpop.f32.mrb[0].mxu0
    %676 = vmatprep.mubr.f32.mxu0 0.0
    %677 = vmatmul.mubr.f32.gmra.mrb[0].mxu0 %v521
    %v678 = vpop.f32.mrb[0].mxu0
    %v679 = vadd.f32 %v545, %v678
    %v680 = vpop.f32.mrb[0].mxu0
    %681 = vmatprep.mubr.f32.mxu0 0.0
    %682 = vmatmul.mubr.f32.gmra.mrb[0].mxu0 %v522
    %v683 = vpop.f32.mrb[0].mxu0
    %v684 = vadd.f32 %v545, %v683
    %v685 = vpop.f32.mrb[0].mxu0
    %686 = vmatprep.mubr.f32.mxu0 0.0
    %687 = vmatmul.mubr.f32.gmra.mrb[0].mxu0 %v523
    %v688 = vpop.f32.mrb[0].mxu0
    %v689 = vadd.f32 %v545, %v688
    %v690 = vpop.f32.mrb[0].mxu0
    %691 = vdwg.mxu0
    %vm692 = vcmp.ge.f32.partialorder %v614, 0.0
    %vm693 = vcmp.ge.f32.partialorder %v619, 0.0
    %vm694 = vcmp.ge.f32.partialorder %v624, 0.0
    %vm695 = vcmp.ge.f32.partialorder %v629, 0.0
    %vm696 = vcmp.ge.f32.partialorder %v634, 0.0
    %vm697 = vcmp.ge.f32.partialorder %v639, 0.0
    %vm698 = vcmp.ge.f32.partialorder %v644, 0.0
    %vm699 = vcmp.ge.f32.partialorder %v649, 0.0
    %vm700 = vcmp.ge.f32.partialorder %v654, 0.0
    %vm701 = vcmp.ge.f32.partialorder %v659, 0.0
    %vm702 = vcmp.ge.f32.partialorder %v664, 0.0
    %vm703 = vcmp.ge.f32.partialorder %v669, 0.0
    %vm704 = vcmp.ge.f32.partialorder %v674, 0.0
    %vm705 = vcmp.ge.f32.partialorder %v679, 0.0
    %vm706 = vcmp.ge.f32.partialorder %v684, 0.0
    %vm707 = vcmp.ge.f32.partialorder %v689, 0.0
    %v708 = vmul.f32 %v614, 0.01
    %v709 = vmul.f32 %v619, 0.01
    %v710 = vmul.f32 %v624, 0.01
    %v711 = vmul.f32 %v629, 0.01
    %v712 = vmul.f32 %v634, 0.01
    %v713 = vmul.f32 %v639, 0.01
    %v714 = vmul.f32 %v644, 0.01
    %v715 = vmul.f32 %v649, 0.01
    %v716 = vmul.f32 %v654, 0.01
    %v717 = vmul.f32 %v659, 0.01
    %v718 = vmul.f32 %v664, 0.01
    %v719 = vmul.f32 %v669, 0.01
    %v720 = vmul.f32 %v674, 0.01
    %v721 = vmul.f32 %v679, 0.01
    %v722 = vmul.f32 %v684, 0.01
    %v723 = vmul.f32 %v689, 0.01
    %v724 = vsel %vm692, %v614, %v708
    %v725 = vsel %vm693, %v619, %v709
    %v726 = vsel %vm694, %v624, %v710
    %v727 = vsel %vm695, %v629, %v711
    %v728 = vsel %vm696, %v634, %v712
    %v729 = vsel %vm697, %v639, %v713
    %v730 = vsel %vm698, %v644, %v714
    %v731 = vsel %vm699, %v649, %v715
    %v732 = vsel %vm700, %v654, %v716
    %v733 = vsel %vm701, %v659, %v717
    %v734 = vsel %vm702, %v664, %v718
    %v735 = vsel %vm703, %v669, %v719
    %v736 = vsel %vm704, %v674, %v720
    %v737 = vsel %vm705, %v679, %v721
    %v738 = vsel %vm706, %v684, %v722
    %v739 = vsel %vm707, %v689, %v723
    %740 = vst [vmem:[#allocation5] sm:$0xff] %v724
    %741 = vst [vmem:[#allocation5 + $0x8] sm:$0xff] %v725
    %742 = vst [vmem:[#allocation5 + $0x10] sm:$0xff] %v726
    %743 = vst [vmem:[#allocation5 + $0x18] sm:$0xff] %v727
    %744 = vst [vmem:[#allocation5 + $0x20] sm:$0xff] %v728
    %745 = vst [vmem:[#allocation5 + $0x28] sm:$0xff] %v729
    %746 = vst [vmem:[#allocation5 + $0x30] sm:$0xff] %v730
    %747 = vst [vmem:[#allocation5 + $0x38] sm:$0xff] %v731
    %748 = vst [vmem:[#allocation5 + $0x40] sm:$0xff] %v732
    %749 = vst [vmem:[#allocation5 + $0x48] sm:$0xff] %v733
    %750 = vst [vmem:[#allocation5 + $0x50] sm:$0xff] %v734
    %751 = vst [vmem:[#allocation5 + $0x58] sm:$0xff] %v735
    %752 = vst [vmem:[#allocation5 + $0x60] sm:$0xff] %v736
    %753 = vst [vmem:[#allocation5 + $0x68] sm:$0xff] %v737
    %754 = vst [vmem:[#allocation5 + $0x70] sm:$0xff] %v738
    %755 = vst [vmem:[#allocation5 + $0x78] sm:$0xff] %v739
    // Predicated region
    $region34: #{tpu_custom_call.1} parent=1 // pred_check
      _
    $region35: #{tpu_custom_call.1} parent=1 // pred_check_branch
      %757 = sbr.rel (0) target = $region37
    $region36: #{tpu_custom_call.1} parent=1 // pred_region
      %s759 = ssub.s32 2048, 2048
      %760 = vsyncadd [#allocation4], %s759
      %s761 = sshll.u32 [#allocation5], 4
      %s762 = int_to_ptr.vmem [resolvable:$true] %s761
      %767 = dma.vmem_to_hbm [thread:$0]  %s762, 2048, %s7, [#allocation4], 128, 128, 8
    $region37: #{tpu_custom_call.1} parent=1 // pred_fallthru
      _
    // Predicated region
    $region38: #{tpu_custom_call.1} parent=1 // pred_check
      _
    $region39: #{tpu_custom_call.1} parent=1 // pred_check_branch
      %769 = sbr.rel (0) target = $region41
    $region40: #{tpu_custom_call.1} parent=1 // pred_region
      %770 = dma.done [#allocation4], 2048
    $region41: #{tpu_custom_call.1} parent=1 // pred_fallthru
      _
    %771 = vsyncpa [#allocation3], 1
    %772 = vsyncpa [#allocation4], 1

</llo_original>
